<compile_context>
chip_gen: v6e
topology: v6e:2x2x1
jax: 0.10.0
libtpu: 0.0.40
codegen_flags: <defaults>
</compile_context>

<pallas_src>
import functools
import numpy as np
import jax
import jax.numpy as jnp
from jax import lax
from jax.experimental import pallas as pl
from jax.experimental.pallas import tpu as pltpu


def _round_up(x, m):
    return ((x + m - 1) // m) * m


# --------------------------------------------------------------------------------------
# Tap table for the sub-pixel decomposition.
# With the zero-padded input flattened to rows m = b*Hp*Wp + i*Wp + j, the tap
# (p, q) = (dr+r, dc+s) of phase (dr, dc) reads row m + p*Wp + q.  _VIEW_TAPS
# lists, for each of the 9 shifted views v = p*3 + q, the (weight-tap index t,
# phase ph) pairs that consume it (16 pairs total).
# --------------------------------------------------------------------------------------
def _tap_table():
    table = []
    for p in range(3):
        for q in range(3):
            tl = []
            for dr in range(2):
                r = p - dr
                if r not in (0, 1):
                    continue
                for dc in range(2):
                    s = q - dc
                    if s not in (0, 1):
                        continue
                    ph = 2 * dr + dc
                    tl.append((ph * 4 + r * 2 + s, ph))
            table.append(tuple(tl))
    return tuple(table)


_VIEW_TAPS = _tap_table()


# --------------------------------------------------------------------------------------
# Pallas kernel: fused sub-pixel ConvTranspose + folded BN affine + activation
# --------------------------------------------------------------------------------------
def _convt_kernel(x_ref, w_ref, scale_ref, shift_ref, o_ref, *acc_scratch,
                  coutp, act, multi_k):
    # x_ref:       (9, tm, kt)     bf16 : 9 row-shifted views of the padded input
    # w_ref:       (16, kt, coutp) bf16 : per-(phase, tap) weight slices
    # scale/shift: (1, 4*coutp)    f32  : folded conv-bias + BatchNorm affine
    # o_ref:       (tm, 4*coutp)        : phase-stacked, lane-dense output
    # acc_scratch: optional (tm, 4*coutp) f32 accumulator (only when multi_k)
    #
    # View-major loads (each of the 9 views read once), phase-major register
    # accumulation: each phase is the sum of 4 chained dots (no per-tap RMW).
    psums = [None, None, None, None]
    for v in range(9):
        xv = x_ref[v]                                            # (tm, kt) bf16
        for t, ph in _VIEW_TAPS[v]:
            d = jnp.dot(xv, w_ref[t], preferred_element_type=jnp.float32)
            psums[ph] = d if psums[ph] is None else psums[ph] + d

    def epilogue(y):
        y = y * scale_ref[...] + shift_ref[...]
        if act == "leaky_relu":
            y = jnp.where(y >= 0.0, y, 0.2 * y)
        elif act == "tanh":
            y = jnp.tanh(y)
        o_ref[...] = y.astype(o_ref.dtype)

    if multi_k:
        acc_ref = acc_scratch[0]
        k = pl.program_id(1)

        @pl.when(k == 0)
        def _():
            acc_ref[...] = jnp.zeros_like(acc_ref)

        for ph in range(4):                       # 4 accumulator RMWs per K step
            acc_ref[:, ph * coutp:(ph + 1) * coutp] += psums[ph]

        @pl.when(k == pl.num_programs(1) - 1)
        def _():
            epilogue(acc_ref[...])
    else:
        # Single K step: no VMEM accumulator, one lane-dense store.
        epilogue(jnp.concatenate(psums, axis=1))


def conv_transpose_bn_act(x_nhwc, layer, act, out_dtype):
    """One fused ConvTranspose2d(4,2,1) + BN(eval) + activation layer."""
    B, H, W, Cin = x_nhwc.shape
    cout, coutp = layer["cout"], layer["coutp"]
    Hp, Wp = H + 2, W + 2
    M0 = B * Hp * Wp                          # output rows over the padded grid

    # Bigger row tiles on the small-channel (large-spatial, HBM-bound) layers.
    if Cin <= 64:
        tm_cap = 2048
    elif Cin <= 128:
        tm_cap = 1024
    else:
        tm_cap = 512
    tm = min(tm_cap, _round_up(M0, 128))
    nrt = pl.cdiv(M0, tm)
    max_shift = 2 * Wp + 2

    # Zero-pad spatially by 1, flatten rows (b, i, j), cast to bf16.
    xpad = jnp.pad(x_nhwc, ((0, 0), (1, 1), (1, 1), (0, 0))).astype(jnp.bfloat16)
    xflat = xpad.reshape(M0, Cin)
    xflat = jnp.pad(xflat, ((0, nrt * tm + max_shift - M0), (0, 0)))

    # 9 row-shifted views as static contiguous slices (no gather):
    #   x9[i, v, r, :] = xflat[i*tm + shift_v + r, :]
    shifts = [p * Wp + q for p in range(3) for q in range(3)]
    x9 = jnp.stack(
        [xflat[s:s + nrt * tm].reshape(nrt, tm, Cin) for s in shifts], axis=1)

    kt = 256 if (Cin > 256 and Cin % 256 == 0) else Cin          # K tiling
    nk = Cin // kt
    multi_k = nk > 1
    width = 4 * coutp                                            # multiple of 128

    out = pl.pallas_call(
        functools.partial(_convt_kernel, coutp=coutp, act=act, multi_k=multi_k),
        out_shape=jax.ShapeDtypeStruct((nrt * tm, width), out_dtype),
        grid_spec=pltpu.PrefetchScalarGridSpec(
            num_scalar_prefetch=0,
            grid=(nrt, nk),
            in_specs=[
                pl.BlockSpec((None, 9, tm, kt), lambda i, k: (i, 0, 0, k)),
                pl.BlockSpec((16, kt, coutp), lambda i, k: (0, k, 0)),
                pl.BlockSpec((1, width), lambda i, k: (0, 0)),
                pl.BlockSpec((1, width), lambda i, k: (0, 0)),
            ],
            out_specs=pl.BlockSpec((tm, width), lambda i, k: (i, 0)),
            scratch_shapes=([pltpu.VMEM((tm, width), jnp.float32)]
                            if multi_k else []),
        ),
        compiler_params=pltpu.CompilerParams(
            dimension_semantics=("parallel", "arbitrary"),
            vmem_limit_bytes=48 * 1024 * 1024),
    )(x9, layer["wk"], layer["scale4"], layer["shift4"])

    # Depth-to-space: drop junk (padding) rows/cols/lanes, interleave 4 phases.
    out = out[:M0].reshape(B, Hp, Wp, 4, coutp)[:, :H, :W, :, :cout]
    out = out.reshape(B, H, W, 2, 2, cout)
    out = out.transpose(0, 1, 3, 2, 4, 5).reshape(B, 2 * H, 2 * W, cout)
    return out


# --------------------------------------------------------------------------------------
# Pallas kernel: fully-connected layer (nn.Linear), bias-only epilogue
# --------------------------------------------------------------------------------------
def _fc_kernel(z_ref, w_ref, b_ref, o_ref):
    acc = jnp.dot(z_ref[...], w_ref[...], preferred_element_type=jnp.float32)
    o_ref[...] = (acc + b_ref[...]).astype(o_ref.dtype)


def _largest_block(n, cap, step=128):
    d = (min(n, cap) // step) * step
    while d >= step:
        if n % d == 0:
            return d
        d -= step
    return n


def fc_forward(z, w_bf16, b_row):
    B, L = z.shape
    Fo = w_bf16.shape[1]
    Bp = _round_up(max(B, 8), 8)
    zp = jnp.pad(z, ((0, Bp - B), (0, 0))).astype(jnp.bfloat16)
    fo_t = _largest_block(Fo, 2048)           # tile the output feature dim
    nf = Fo // fo_t
    out = pl.pallas_call(
        _fc_kernel,
        out_shape=jax.ShapeDtypeStruct((Bp, Fo), jnp.float32),
        grid_spec=pltpu.PrefetchScalarGridSpec(
            num_scalar_prefetch=0,
            grid=(nf,),
            in_specs=[
                pl.BlockSpec((Bp, L), lambda j: (0, 0)),
                pl.BlockSpec((L, fo_t), lambda j: (0, j)),
                pl.BlockSpec((1, fo_t), lambda j: (0, j)),
            ],
            out_specs=pl.BlockSpec((Bp, fo_t), lambda j: (0, j)),
        ),
        compiler_params=pltpu.CompilerParams(dimension_semantics=("parallel",)),
    )(zp, w_bf16, b_row)
    return out[:B]


# --------------------------------------------------------------------------------------
# Parameters (deterministic synthetic init; shapes follow the PyTorch __init__)
# --------------------------------------------------------------------------------------
def init_params(key, cnum, latent_dim, out_ch=3, eps=1e-5):
    C = cnum * 16
    fc_out = C * 3 * 3
    chans = [(C, C // 2), (C // 2, C // 4), (C // 4, C // 8), (C // 8, C // 16),
             (C // 16, out_ch)]
    keys = iter(jax.random.split(key, 2 + 6 * len(chans)))
    fc_w = jax.random.normal(next(keys), (fc_out, latent_dim), jnp.float32) \
        / np.sqrt(latent_dim)                            # (out, in) like nn.Linear
    fc_b = 0.01 * jax.random.normal(next(keys), (fc_out,), jnp.float32)
    p = {
        "fc_w": fc_w, "fc_b": fc_b,
        "fc_w_k": fc_w.T.astype(jnp.bfloat16),           # (latent, fc_out) bf16
        "fc_b_k": fc_b[None, :].astype(jnp.float32),     # (1, fc_out) f32
    }
    layers = []
    for li, (cin, cout) in enumerate(chans):
        w = jax.random.normal(next(keys), (cin, cout, 4, 4), jnp.float32) / np.sqrt(cin * 16)
        b = 0.01 * jax.random.normal(next(keys), (cout,), jnp.float32)
        has_bn = li < len(chans) - 1
        if has_bn:
            gamma = 1.0 + 0.1 * jax.random.normal(next(keys), (cout,), jnp.float32)
            beta = 0.1 * jax.random.normal(next(keys), (cout,), jnp.float32)
            rmean = 0.1 * jax.random.normal(next(keys), (cout,), jnp.float32)
            rvar = 1.0 + 0.1 * jnp.abs(jax.random.normal(next(keys), (cout,), jnp.float32))
            inv_std = 1.0 / jnp.sqrt(rvar + eps)
            scale = gamma * inv_std
            shift = beta + (b - rmean) * scale           # fold conv bias + BN affine
        else:
            gamma = beta = rmean = rvar = None
            scale = jnp.ones((cout,), jnp.float32)
            shift = b
        # Phase packing: per-phase width is a multiple of 32, so the 4-phase
        # stacked output block (4*coutp lanes) stays a multiple of 128 even for
        # cout < 128 (final RGB layer: 128 lanes instead of 512).
        coutp = max(32, _round_up(cout, 32))
        # Sub-pixel weight taps, t = (2*dr+dc)*4 + r*2 + s, padded on Cout, bf16.
        taps_w = []
        for dr in range(2):
            for dc in range(2):
                for r in range(2):
                    for s in range(2):
                        taps_w.append(w[:, :, 3 - dr - 2 * r, 3 - dc - 2 * s])
        wk = jnp.stack(taps_w, axis=0)                   # (16, cin, cout)
        wk = jnp.pad(wk, ((0, 0), (0, 0), (0, coutp - cout))).astype(jnp.bfloat16)
        scale4 = jnp.tile(jnp.pad(scale, (0, coutp - cout)), 4)[None, :]
        shift4 = jnp.tile(jnp.pad(shift, (0, coutp - cout)), 4)[None, :]
        layers.append(dict(w=w, b=b, gamma=gamma, beta=beta, rmean=rmean, rvar=rvar,
                           cout=cout, coutp=coutp, wk=wk,
                           scale4=scale4.astype(jnp.float32),
                           shift4=shift4.astype(jnp.float32), has_bn=has_bn))
    p["layers"] = layers
    return p


# --------------------------------------------------------------------------------------
# VAE_Decoder forward (Pallas path)
# --------------------------------------------------------------------------------------
def vae_decoder_forward(z, params, cnum):
    B = z.shape[0]
    h = fc_forward(z, params["fc_w_k"], params["fc_b_k"])        # nn.Linear
    x = h.reshape(B, cnum * 16, 3, 3).transpose(0, 2, 3, 1)      # NCHW -> NHWC
    n = len(params["layers"])
    for li, layer in enumerate(params["layers"]):
        act = "leaky_relu" if li < n - 1 else "tanh"
        out_dtype = jnp.float32 if li == n - 1 else jnp.bfloat16
        x = conv_transpose_bn_act(x, layer, act, out_dtype)
    return x.transpose(0, 3, 1, 2)                               # NHWC -> NCHW


# --------------------------------------------------------------------------------------
# Pure-JAX reference (XLA conv, bf16-rounded operands to mirror kernel numerics)
# --------------------------------------------------------------------------------------
def _bf16_round(x):
    return x.astype(jnp.bfloat16).astype(jnp.float32)


def _ref_conv_transpose(x, w_t, b):
    w = jnp.transpose(w_t[:, :, ::-1, ::-1], (1, 0, 2, 3))       # (Cout, Cin, 4, 4)
    out = lax.conv_general_dilated(
        x, w, window_strides=(1, 1), padding=[(2, 2), (2, 2)],
        lhs_dilation=(2, 2), dimension_numbers=("NCHW", "OIHW", "NCHW"))
    return out + b[None, :, None, None]


def ref_forward(z, params, cnum, eps=1e-5):
    B = z.shape[0]
    h = _bf16_round(z) @ _bf16_round(params["fc_w"]).T + params["fc_b"]
    x = h.reshape(B, cnum * 16, 3, 3)
    for layer in params["layers"]:
        x = _ref_conv_transpose(_bf16_round(x), _bf16_round(layer["w"]), layer["b"])
        if layer["has_bn"]:
            inv_std = 1.0 / jnp.sqrt(layer["rvar"] + eps)
            x = (x - layer["rmean"][None, :, None, None]) \
                * (layer["gamma"] * inv_std)[None, :, None, None] \
                + layer["beta"][None, :, None, None]
            x = jnp.where(x >= 0, x, 0.2 * x)
        else:
            x = jnp.tanh(x)
    return x


if __name__ == "__main__":
    # Small test config (reference module uses cnum=64, latent_dim=128).
    # cnum=32 exercises both kernel paths: layer 0 (Cin=512) uses the K-tiled
    # scratch-accumulator path, layers 1-4 use the single-K register path, and
    # layers 2-4 exercise the packed (coutp=64/32) output width.
    cnum = 32
    latent_dim = 64
    batch = 2

    key = jax.random.PRNGKey(0)
    kp, kz = jax.random.split(key)
    params = init_params(kp, cnum, latent_dim)
    z = jax.random.normal(kz, (batch, latent_dim), jnp.float32)

    out = jax.block_until_ready(vae_decoder_forward(z, params, cnum))
    assert out.shape == (batch, 3, 96, 96), out.shape

    ref = jax.block_until_ready(ref_forward(z, params, cnum))
    out_np, ref_np = np.asarray(out), np.asarray(ref)
    if not np.allclose(out_np, ref_np, rtol=2e-2, atol=2e-2):
        raise AssertionError(
            "mismatch vs reference, max abs diff = "
            f"{np.max(np.abs(out_np - ref_np))}")
    print("KERNEL_OK")
</pallas_src>

<mosaic_0001>
module attributes {stable_mosaic.version = 11 : i64} {
  func.func @_fc_kernel(%arg0: i32, %arg1: memref<8x64xbf16, #tpu.memory_space<vmem>>, %arg2: memref<64x1536xbf16, #tpu.memory_space<vmem>>, %arg3: memref<1x1536xf32, #tpu.memory_space<vmem>>, %arg4: memref<8x1536xf32, #tpu.memory_space<vmem>>) attributes {dimension_semantics = [#tpu.dimension_semantics<parallel>], iteration_bounds = array<i64: 3>, scalar_prefetch = 0 : i64, scratch_operands = 0 : i64, tpu.core_type = #tpu.core_type<tc>, window_params = [{pipeline_mode = #tpu.pipeline_mode<synchronous>, transform_indices = @transform_0, window_bounds = array<i64: 8, 64>}, {transform_indices = @transform_1, window_bounds = array<i64: 64, 1536>}, {transform_indices = @transform_2, window_bounds = array<i64: 1, 1536>}, {transform_indices = @transform_3, window_bounds = array<i64: 8, 1536>}]} {
    %c0 = arith.constant 0 : index
    %c0_0 = arith.constant 0 : index
    %0 = vector.load %arg1[%c0, %c0_0] : memref<8x64xbf16, #tpu.memory_space<vmem>>, vector<8x64xbf16>
    %c0_1 = arith.constant 0 : index
    %c0_2 = arith.constant 0 : index
    %1 = vector.load %arg2[%c0_1, %c0_2] : memref<64x1536xbf16, #tpu.memory_space<vmem>>, vector<64x1536xbf16>
    %cst = arith.constant dense<0.000000e+00> : vector<8x1536xf32>
    %2 = tpu.matmul %0, %1, %cst {dimension_numbers = #tpu.dot_dimension_numbers<[1], [0], [0], [1], [0, 0, 1, 1], [], []>} : vector<8x64xbf16>, vector<64x1536xbf16>, vector<8x1536xf32> -> vector<8x1536xf32>
    %c0_3 = arith.constant 0 : index
    %c0_4 = arith.constant 0 : index
    %3 = vector.load %arg3[%c0_3, %c0_4] : memref<1x1536xf32, #tpu.memory_space<vmem>>, vector<1x1536xf32>
    %4 = vector.broadcast %3 : vector<1x1536xf32> to vector<8x1536xf32>
    %5 = arith.addf %2, %4 : vector<8x1536xf32>
    %c0_5 = arith.constant 0 : index
    %c0_6 = arith.constant 0 : index
    %6 = vector.load %arg4[%c0_5, %c0_6] : memref<8x1536xf32, #tpu.memory_space<vmem>>, vector<8x1536xf32>
    tpu.vector_store %arg4[%c0_5, %c0_6], %5 {strides = array<i32>} : memref<8x1536xf32, #tpu.memory_space<vmem>>, vector<8x1536xf32>,
    return
  }
  func.func @transform_0(%arg0: i32) -> (i32, i32) {
    %c0_i32 = arith.constant 0 : i32
    %c0_i32_0 = arith.constant 0 : i32
    %c0_i32_1 = arith.constant 0 : i32
    return %c0_i32, %c0_i32_0 : i32, i32
  }
  func.func @transform_1(%arg0: i32) -> (i32, i32) {
    %c0_i32 = arith.constant 0 : i32
    %c0_i32_0 = arith.constant 0 : i32
    return %c0_i32, %arg0 : i32, i32
  }
  func.func @transform_2(%arg0: i32) -> (i32, i32) {
    %c0_i32 = arith.constant 0 : i32
    %c0_i32_0 = arith.constant 0 : i32
    return %c0_i32, %arg0 : i32, i32
  }
  func.func @transform_3(%arg0: i32) -> (i32, i32) {
    %c0_i32 = arith.constant 0 : i32
    %c0_i32_0 = arith.constant 0 : i32
    return %c0_i32, %arg0 : i32, i32
  }
}

</mosaic_0001>

<llo_original>
// kernel: tpu_custom_call.1
$region0: #{tpu_custom_call.1}
  #allocation0 [shape = 'u32[]', space=smem, size = 0x4, offset = 0x4, fixed_abs, tag = 'smem constant byte address 0x4 - core index']
  #allocation1 [shape = 'u32[144,128]{1,0:T(1,128)}', space=vmem, size = 0x12000, scoped, tag = 'internal scratch']
  %s0 = inlined_call_operand.hbm [shape: bf16[8,64], index: 0, kind: input, shape index: {}]
  %s1 = inlined_call_operand.hbm [shape: bf16[64,4608], index: 1, kind: input, shape index: {}]
  %s2 = inlined_call_operand.hbm [shape: f32[1,4608], index: 2, kind: input, shape index: {}]
  %s3 = inlined_call_operand.hbm [shape: f32[8,4608], index: 3, kind: output, shape index: {}]
  %s4 = sld [smem:[#allocation0]]
  $region57: #{tpu_custom_call.1} parent=0
    _
  %s6 = ssub.s32 1, %s4
  %s7 = scalar_select 0, %s6, %s4
  $region1: #{tpu_custom_call.1} parent=0
    #allocation2 [shape = 'u8[2048]{0}', space=vmem, size = 0x800, scoped, tag = 'input window, operand 0, single buffered']
    #allocation3 [shape = 's32[2]{0}', space=sflag, size = 0x8, scoped, tag = 'scoped memory for tpu_custom_call.1']
    #allocation4 [shape = 's32[2]{0}', space=sflag, size = 0x8, scoped, tag = 'scoped memory for tpu_custom_call.1']
    #allocation5 [shape = 'u8[393216]{0}', space=vmem, size = 0x60000, scoped, tag = 'input window, operand 1']
    #allocation6 [shape = 's32[2]{0}', space=sflag, size = 0x8, scoped, tag = 'scoped memory for tpu_custom_call.1']
    #allocation7 [shape = 'u8[12288]{0}', space=vmem, size = 0x3000, scoped, tag = 'input window, operand 2']
    #allocation8 [shape = 'u8[98304]{0}', space=vmem, size = 0x18000, scoped, tag = 'output window, operand 0']
    %8 = vsyncpa [#allocation3], 0
    %9 = vsyncpa [#allocation6], 0
    %s10 = scalar_lea.sflag [#allocation6], 1
    %11 = vsyncpa %s10, 0
    %12 = vsyncpa [#allocation4], 0
    %s13 = scalar_lea.sflag [#allocation4], 1
    %14 = vsyncpa %s13, 0
    loop: start=0, step=1, limit=5
    $region2: #{tpu_custom_call.1} parent=1 // loop_pre_header
      _
    $region3: #{tpu_custom_call.1} parent=1 // loop_header
      %s16 = sphi 0, %s20
      %p17 = scmp.ge.s32.totalorder %s16, 5
      %s24 = sphi 0, %s24
      %s26 = sphi 0, %s24
      %s27 = sphi 0, %s26
      %s41 = sphi 0, %s27
      %s47 = sphi 0, %s49
      %s50 = sphi 0, %s47
      %s51 = sphi 0, %s50
      %s67 = sphi 0, %s51
      %s73 = sphi 0, %s75
      %s76 = sphi 0, %s73
      %s77 = sphi 0, %s76
      %s93 = sphi 0, %s77
      %s99 = sphi 0, %s101
      %s102 = sphi 0, %s99
      %s103 = sphi 0, %s102
      %s119 = sphi 0, %s103
    $region4: #{tpu_custom_call.1} parent=1 // loop_header_branch
      %19 = sbr.rel (%p17) target = $region8
    $region5: #{tpu_custom_call.1} parent=1 // loop_body
      %s21 = ssub.s32 %s16, 1
      %s22 = ssub.s32 %s16, 2
      %s23 = sadd.s32 %s16, 1
      %s25 = sadd.s32 %s24, 1
      %p28 = scmp.eq.s32.totalorder %s16, 2
      %p29 = scmp.ne.s32.totalorder %s24, %s26
      %p30 = scmp.eq.s32.totalorder %s16, 0
      %p31 = por %p29, %p30
      %p32 = scmp.ne.s32.totalorder %s24, %s26
      %p33 = scmp.eq.s32.totalorder %s21, 2
      %p34 = por %p32, %p33
      %p35 = scmp.ne.s32.totalorder %s26, %s27
      %p36 = scmp.eq.s32.totalorder %s21, 0
      %p37 = por %p35, %p36
      %p38 = scmp.ne.s32.totalorder %s26, %s27
      %p39 = scmp.eq.s32.totalorder %s22, 2
      %p40 = por %p38, %p39
      %p42 = scmp.ne.s32.totalorder %s27, %s41
      %p43 = scmp.eq.s32.totalorder %s22, 0
      %p44 = por %p42, %p43
      %s45 = ssub.s32 %s16, %s23
      %p46 = scmp.eq.s32.totalorder %s45, 0
      %s48 = sadd.s32 %s47, 1
      %s49 = scalar_select %p46, %s47, %s48
      %p52 = pneg %p46
      %p53 = scmp.eq.s32.totalorder %s16, 2
      %p54 = por %p52, %p53
      %p55 = scmp.ne.s32.totalorder %s47, %s50
      %p56 = scmp.eq.s32.totalorder %s16, 0
      %p57 = por %p55, %p56
      %p58 = scmp.ne.s32.totalorder %s47, %s50
      %p59 = scmp.eq.s32.totalorder %s21, 2
      %p60 = por %p58, %p59
      %p61 = scmp.ne.s32.totalorder %s50, %s51
      %p62 = scmp.eq.s32.totalorder %s21, 0
      %p63 = por %p61, %p62
      %p64 = scmp.ne.s32.totalorder %s50, %s51
      %p65 = scmp.eq.s32.totalorder %s22, 2
      %p66 = por %p64, %p65
      %p68 = scmp.ne.s32.totalorder %s51, %s67
      %p69 = scmp.eq.s32.totalorder %s22, 0
      %p70 = por %p68, %p69
      %s71 = ssub.s32 %s16, %s23
      %p72 = scmp.eq.s32.totalorder %s71, 0
      %s74 = sadd.s32 %s73, 1
      %s75 = scalar_select %p72, %s73, %s74
      %p78 = pneg %p72
      %p79 = scmp.eq.s32.totalorder %s16, 2
      %p80 = por %p78, %p79
      %p81 = scmp.ne.s32.totalorder %s73, %s76
      %p82 = scmp.eq.s32.totalorder %s16, 0
      %p83 = por %p81, %p82
      %p84 = scmp.ne.s32.totalorder %s73, %s76
      %p85 = scmp.eq.s32.totalorder %s21, 2
      %p86 = por %p84, %p85
      %p87 = scmp.ne.s32.totalorder %s76, %s77
      %p88 = scmp.eq.s32.totalorder %s21, 0
      %p89 = por %p87, %p88
      %p90 = scmp.ne.s32.totalorder %s76, %s77
      %p91 = scmp.eq.s32.totalorder %s22, 2
      %p92 = por %p90, %p91
      %p94 = scmp.ne.s32.totalorder %s77, %s93
      %p95 = scmp.eq.s32.totalorder %s22, 0
      %p96 = por %p94, %p95
      %s97 = ssub.s32 %s16, %s23
      %p98 = scmp.eq.s32.totalorder %s97, 0
      %s100 = sadd.s32 %s99, 1
      %s101 = scalar_select %p98, %s99, %s100
      %p104 = pneg %p98
      %p105 = scmp.eq.s32.totalorder %s16, 2
      %p106 = por %p104, %p105
      %p107 = scmp.ne.s32.totalorder %s99, %s102
      %p108 = scmp.eq.s32.totalorder %s16, 0
      %p109 = por %p107, %p108
      %p110 = scmp.ne.s32.totalorder %s99, %s102
      %p111 = scmp.eq.s32.totalorder %s21, 2
      %p112 = por %p110, %p111
      %p113 = scmp.ne.s32.totalorder %s102, %s103
      %p114 = scmp.eq.s32.totalorder %s21, 0
      %p115 = por %p113, %p114
      %p116 = scmp.ne.s32.totalorder %s102, %s103
      %p117 = scmp.eq.s32.totalorder %s22, 2
      %p118 = por %p116, %p117
      %p120 = scmp.ne.s32.totalorder %s103, %s119
      %p121 = scmp.eq.s32.totalorder %s22, 0
      %p122 = por %p120, %p121
      %p123 = scmp.le.s32.totalorder 1, %s16
      %p124 = scmp.lt.s32.totalorder %s16, 4
      %p125 = pnand %p123, %p124
      %p126 = pneg %p125
      // Predicated region
      $region9: #{tpu_custom_call.1} parent=5 // pred_check
        _
      $region10: #{tpu_custom_call.1} parent=5 // pred_check_branch
        %128 = sbr.rel (%p125) target = $region12
      $region11: #{tpu_custom_call.1} parent=5 // pred_region
        %s129 = ssub.s32 %s16, 1
        // Predicated region
        $region13: #{tpu_custom_call.1} parent=11 // pred_check
          %p130 = pneg %p37
        $region14: #{tpu_custom_call.1} parent=11 // pred_check_branch
          %132 = sbr.rel (%p130) target = $region16
        $region15: #{tpu_custom_call.1} parent=11 // pred_region
          %s134 = ssub.s32 64, 64
          %135 = vsyncadd [#allocation3], %s134
          %s137 = sshll.u32 [#allocation2], 4
          %s138 = int_to_ptr.vmem [resolvable:$true] %s137
          %140 = dma.hbm_to_vmem [thread:$0]  %s0, 64, %s138, [#allocation3]
        $region16: #{tpu_custom_call.1} parent=11 // pred_fallthru
          _
      $region12: #{tpu_custom_call.1} parent=5 // pred_fallthru
        _
      %p141 = scmp.lt.s32.totalorder %s16, 3
      // Predicated region
      $region17: #{tpu_custom_call.1} parent=5 // pred_check
        %p142 = pneg %p141
      $region18: #{tpu_custom_call.1} parent=5 // pred_check_branch
        %144 = sbr.rel (%p142) target = $region20
      $region19: #{tpu_custom_call.1} parent=5 // pred_region
        // Predicated region
        $region21: #{tpu_custom_call.1} parent=19 // pred_check
          %p145 = pneg %p57
        $region22: #{tpu_custom_call.1} parent=19 // pred_check_branch
          %147 = sbr.rel (%p145) target = $region24
        $region23: #{tpu_custom_call.1} parent=19 // pred_region
          %s148 = sand.u32 %s16, 1
          %s149 = scalar_lea.sflag [#allocation6], %s148
          %s150 = sand.u32 %s47, 1
          %s151 = smul.addr %s150, 384
          %s152 = scalar_lea.vmem [#allocation5], %s151
          %s153 = smul.u32 12, %s16
          %s155 = ssub.s32 6144, 6144
          %156 = vsyncadd %s149, %s155
          %s157 = smul.addr %s153, 64
          %s158 = scalar_lea.hbm %s1, %s157
          %s159 = sshll.u32 %s152, 4
          %s160 = int_to_ptr.vmem [resolvable:$true] %s159
          %165 = dma.hbm_to_vmem [thread:$0]  %s158, 6144, %s160, %s149, 2304, 768, 48
        $region24: #{tpu_custom_call.1} parent=19 // pred_fallthru
          _
        // Predicated region
        $region25: #{tpu_custom_call.1} parent=19 // pred_check
          %p166 = pneg %p83
        $region26: #{tpu_custom_call.1} parent=19 // pred_check_branch
          %168 = sbr.rel (%p166) target = $region28
        $region27: #{tpu_custom_call.1} parent=19 // pred_region
          %s169 = sand.u32 %s16, 1
          %s170 = scalar_lea.sflag [#allocation6], %s169
          %s171 = sand.u32 %s73, 1
          %s172 = smul.addr %s171, 12
          %s173 = scalar_lea.vmem [#allocation7], %s172
          %s174 = smul.u32 12, %s16
          %s176 = ssub.s32 192, 192
          %177 = vsyncadd %s170, %s176
          %s178 = smul.addr %s174, 16
          %s179 = scalar_lea.hbm %s2, %s178
          %s181 = sshll.u32 %s173, 4
          %s182 = int_to_ptr.vmem [resolvable:$true] %s181
          %184 = dma.hbm_to_vmem [thread:$0]  %s179, 192, %s182, %s170
        $region28: #{tpu_custom_call.1} parent=19 // pred_fallthru
          _
      $region20: #{tpu_custom_call.1} parent=5 // pred_fallthru
        _
      %p185 = scmp.le.s32.totalorder 1, %s16
      %p186 = scmp.lt.s32.totalorder %s16, 4
      %p187 = pnand %p185, %p186
      %p188 = pneg %p187
      // Predicated region
      $region29: #{tpu_custom_call.1} parent=5 // pred_check
        _
      $region30: #{tpu_custom_call.1} parent=5 // pred_check_branch
        %190 = sbr.rel (%p187) target = $region32
      $region31: #{tpu_custom_call.1} parent=5 // pred_region
        %s191 = ssub.s32 %s16, 1
        // Predicated region
        $region33: #{tpu_custom_call.1} parent=31 // pred_check
          %p192 = pneg %p37
        $region34: #{tpu_custom_call.1} parent=31 // pred_check_branch
          %194 = sbr.rel (%p192) target = $region36
        $region35: #{tpu_custom_call.1} parent=31 // pred_region
          %195 = dma.done [#allocation3], 64
        $region36: #{tpu_custom_call.1} parent=31 // pred_fallthru
          _
        %s196 = sand.u32 %s21, 1
        %s197 = scalar_lea.sflag [#allocation6], %s196
        %s198 = sand.u32 %s50, 1
        %s199 = smul.addr %s198, 384
        %s200 = scalar_lea.vmem [#allocation5], %s199
        // Predicated region
        $region37: #{tpu_custom_call.1} parent=31 // pred_check
          %p201 = pneg %p63
        $region38: #{tpu_custom_call.1} parent=31 // pred_check_branch
          %203 = sbr.rel (%p201) target = $region40
        $region39: #{tpu_custom_call.1} parent=31 // pred_region
          %204 = dma.done %s197, 6144
        $region40: #{tpu_custom_call.1} parent=31 // pred_fallthru
          _
        %s205 = sand.u32 %s21, 1
        %s206 = scalar_lea.sflag [#allocation6], %s205
        %s207 = sand.u32 %s76, 1
        %s208 = smul.addr %s207, 12
        %s209 = scalar_lea.vmem [#allocation7], %s208
        // Predicated region
        $region41: #{tpu_custom_call.1} parent=31 // pred_check
          %p210 = pneg %p89
        $region42: #{tpu_custom_call.1} parent=31 // pred_check_branch
          %212 = sbr.rel (%p210) target = $region44
        $region43: #{tpu_custom_call.1} parent=31 // pred_region
          %213 = dma.done %s206, 192
        $region44: #{tpu_custom_call.1} parent=31 // pred_fallthru
          _
        %p214 = pneg %p37
        %p215 = pneg %p34
        %s216 = sand.u32 %s21, 1
        %s217 = scalar_lea.sflag [#allocation6], %s216
        %s218 = sand.u32 %s50, 1
        %s219 = smul.addr %s218, 384
        %s220 = scalar_lea.vmem [#allocation5], %s219
        %p221 = pneg %p63
        %p222 = pneg %p60
        %s223 = sand.u32 %s21, 1
        %s224 = scalar_lea.sflag [#allocation6], %s223
        %s225 = sand.u32 %s76, 1
        %s226 = smul.addr %s225, 12
        %s227 = scalar_lea.vmem [#allocation7], %s226
        %p228 = pneg %p89
        %p229 = pneg %p86
        %p230 = pneg %p115
        %p231 = pneg %p112
        %s232 = sand.u32 %s102, 1
        %s233 = scalar_lea.sflag [#allocation4], %s232
        %s234 = sand.u32 %s102, 1
        %s235 = smul.addr %s234, 96
        %s236 = scalar_lea.vmem [#allocation8], %s235
        %s237 = smul.u32 12, %s21
        %s238 = smul.u32 12, %s21
        %s239 = smul.u32 12, %s21
        %v241 = vld [vmem:[#allocation2] sm:$0xf]
        %v242 = vld [vmem:[%s200] sm:$0xff]
        %v243 = vld [vmem:[%s200 + $0x8] sm:$0xff]
        %v244 = vld [vmem:[%s200 + $0x10] sm:$0xff]
        %v245 = vld [vmem:[%s200 + $0x18] sm:$0xff]
        %v246 = vld [vmem:[%s200 + $0x20] sm:$0xff]
        %v247 = vld [vmem:[%s200 + $0x28] sm:$0xff]
        %v248 = vld [vmem:[%s200 + $0x30] sm:$0xff]
        %v249 = vld [vmem:[%s200 + $0x38] sm:$0xff]
        %v250 = vld [vmem:[%s200 + $0x40] sm:$0xff]
        %v251 = vld [vmem:[%s200 + $0x48] sm:$0xff]
        %v252 = vld [vmem:[%s200 + $0x50] sm:$0xff]
        %v253 = vld [vmem:[%s200 + $0x58] sm:$0xff]
        %v254 = vld [vmem:[%s200 + $0x60] sm:$0xff]
        %v255 = vld [vmem:[%s200 + $0x68] sm:$0xff]
        %v256 = vld [vmem:[%s200 + $0x70] sm:$0xff]
        %v257 = vld [vmem:[%s200 + $0x78] sm:$0xff]
        %v258 = vld [vmem:[%s200 + $0x80] sm:$0xff]
        %v259 = vld [vmem:[%s200 + $0x88] sm:$0xff]
        %v260 = vld [vmem:[%s200 + $0x90] sm:$0xff]
        %v261 = vld [vmem:[%s200 + $0x98] sm:$0xff]
        %v262 = vld [vmem:[%s200 + $0xa0] sm:$0xff]
        %v263 = vld [vmem:[%s200 + $0xa8] sm:$0xff]
        %v264 = vld [vmem:[%s200 + $0xb0] sm:$0xff]
        %v265 = vld [vmem:[%s200 + $0xb8] sm:$0xff]
        %v266 = vld [vmem:[%s200 + $0xc0] sm:$0xff]
        %v267 = vld [vmem:[%s200 + $0xc8] sm:$0xff]
        %v268 = vld [vmem:[%s200 + $0xd0] sm:$0xff]
        %v269 = vld [vmem:[%s200 + $0xd8] sm:$0xff]
        %v270 = vld [vmem:[%s200 + $0xe0] sm:$0xff]
        %v271 = vld [vmem:[%s200 + $0xe8] sm:$0xff]
        %v272 = vld [vmem:[%s200 + $0xf0] sm:$0xff]
        %v273 = vld [vmem:[%s200 + $0xf8] sm:$0xff]
        %v274 = vld [vmem:[%s200 + $0x100] sm:$0xff]
        %v275 = vld [vmem:[%s200 + $0x108] sm:$0xff]
        %v276 = vld [vmem:[%s200 + $0x110] sm:$0xff]
        %v277 = vld [vmem:[%s200 + $0x118] sm:$0xff]
        %v278 = vld [vmem:[%s200 + $0x120] sm:$0xff]
        %v279 = vld [vmem:[%s200 + $0x128] sm:$0xff]
        %v280 = vld [vmem:[%s200 + $0x130] sm:$0xff]
        %v281 = vld [vmem:[%s200 + $0x138] sm:$0xff]
        %v282 = vld [vmem:[%s200 + $0x140] sm:$0xff]
        %v283 = vld [vmem:[%s200 + $0x148] sm:$0xff]
        %v284 = vld [vmem:[%s200 + $0x150] sm:$0xff]
        %v285 = vld [vmem:[%s200 + $0x158] sm:$0xff]
        %v286 = vld [vmem:[%s200 + $0x160] sm:$0xff]
        %v287 = vld [vmem:[%s200 + $0x168] sm:$0xff]
        %v288 = vld [vmem:[%s200 + $0x170] sm:$0xff]
        %v289 = vld [vmem:[%s200 + $0x178] sm:$0xff]
        %v290 = vld [vmem:[%s209] sm:$0xff]
        %v291 = vld [vmem:[%s209 + $0x8] sm:$0xf]
        %v294 = vlaneseq
        %v295 = vshrl.u32 %v294, 7
        %v296 = vsub.s32 0, %v295
        %v297 = vrot.slane %v290, %v296
        %v298 = vlaneseq
        %v299 = vshrl.u32 %v298, 7
        %v300 = vsub.s32 1, %v299
        %v301 = vrot.slane %v290, %v300
        %v302 = vlaneseq
        %v303 = vshrl.u32 %v302, 7
        %v304 = vsub.s32 2, %v303
        %v305 = vrot.slane %v290, %v304
        %v306 = vlaneseq
        %v307 = vshrl.u32 %v306, 7
        %v308 = vsub.s32 3, %v307
        %v309 = vrot.slane %v290, %v308
        %v310 = vlaneseq
        %v311 = vshrl.u32 %v310, 7
        %v312 = vsub.s32 4, %v311
        %v313 = vrot.slane %v290, %v312
        %v314 = vlaneseq
        %v315 = vshrl.u32 %v314, 7
        %v316 = vsub.s32 5, %v315
        %v317 = vrot.slane %v290, %v316
        %v318 = vlaneseq
        %v319 = vshrl.u32 %v318, 7
        %v320 = vsub.s32 6, %v319
        %v321 = vrot.slane %v290, %v320
        %v322 = vlaneseq
        %v323 = vshrl.u32 %v322, 7
        %v324 = vsub.s32 7, %v323
        %v325 = vrot.slane %v290, %v324
        %v326 = vlaneseq
        %v327 = vshrl.u32 %v326, 7
        %v328 = vsub.s32 0, %v327
        %v329 = vrot.slane %v291, %v328
        %v330 = vlaneseq
        %v331 = vshrl.u32 %v330, 7
        %v332 = vsub.s32 1, %v331
        %v333 = vrot.slane %v291, %v332
        %v334 = vlaneseq
        %v335 = vshrl.u32 %v334, 7
        %v336 = vsub.s32 2, %v335
        %v337 = vrot.slane %v291, %v336
        %v338 = vlaneseq
        %v339 = vshrl.u32 %v338, 7
        %v340 = vsub.s32 3, %v339
        %v341 = vrot.slane %v291, %v340
        %v402 = vunpack.c.l.b16 %v242
        %v403 = vunpack.c.h.b16 %v242
        %v404 = vunpack.c.l.b16 %v243
        %v405 = vunpack.c.h.b16 %v243
        %v406 = vunpack.c.l.b16 %v244
        %v407 = vunpack.c.h.b16 %v244
        %v408 = vunpack.c.l.b16 %v245
        %v409 = vunpack.c.h.b16 %v245
        %v410 = vunpack.c.l.b16 %v246
        %v411 = vunpack.c.h.b16 %v246
        %v412 = vunpack.c.l.b16 %v247
        %v413 = vunpack.c.h.b16 %v247
        %v414 = vunpack.c.l.b16 %v248
        %v415 = vunpack.c.h.b16 %v248
        %v416 = vunpack.c.l.b16 %v249
        %v417 = vunpack.c.h.b16 %v249
        %v418 = vunpack.c.l.b16 %v250
        %v419 = vunpack.c.h.b16 %v250
        %v420 = vunpack.c.l.b16 %v251
        %v421 = vunpack.c.h.b16 %v251
        %v422 = vunpack.c.l.b16 %v252
        %v423 = vunpack.c.h.b16 %v252
        %v424 = vunpack.c.l.b16 %v253
        %v425 = vunpack.c.h.b16 %v253
        %v426 = vunpack.c.l.b16 %v254
        %v427 = vunpack.c.h.b16 %v254
        %v428 = vunpack.c.l.b16 %v255
        %v429 = vunpack.c.h.b16 %v255
        %v430 = vunpack.c.l.b16 %v256
        %v431 = vunpack.c.h.b16 %v256
        %v432 = vunpack.c.l.b16 %v257
        %v433 = vunpack.c.h.b16 %v257
        %v434 = vunpack.c.l.b16 %v258
        %v435 = vunpack.c.h.b16 %v258
        %v436 = vunpack.c.l.b16 %v259
        %v437 = vunpack.c.h.b16 %v259
        %v438 = vunpack.c.l.b16 %v260
        %v439 = vunpack.c.h.b16 %v260
        %v440 = vunpack.c.l.b16 %v261
        %v441 = vunpack.c.h.b16 %v261
        %v442 = vunpack.c.l.b16 %v262
        %v443 = vunpack.c.h.b16 %v262
        %v444 = vunpack.c.l.b16 %v263
        %v445 = vunpack.c.h.b16 %v263
        %v446 = vunpack.c.l.b16 %v264
        %v447 = vunpack.c.h.b16 %v264
        %v448 = vunpack.c.l.b16 %v265
        %v449 = vunpack.c.h.b16 %v265
        %v450 = vunpack.c.l.b16 %v266
        %v451 = vunpack.c.h.b16 %v266
        %v452 = vunpack.c.l.b16 %v267
        %v453 = vunpack.c.h.b16 %v267
        %v454 = vunpack.c.l.b16 %v268
        %v455 = vunpack.c.h.b16 %v268
        %v456 = vunpack.c.l.b16 %v269
        %v457 = vunpack.c.h.b16 %v269
        %v458 = vunpack.c.l.b16 %v270
        %v459 = vunpack.c.h.b16 %v270
        %v460 = vunpack.c.l.b16 %v271
        %v461 = vunpack.c.h.b16 %v271
        %v462 = vunpack.c.l.b16 %v272
        %v463 = vunpack.c.h.b16 %v272
        %v464 = vunpack.c.l.b16 %v273
        %v465 = vunpack.c.h.b16 %v273
        %v466 = vunpack.c.l.b16 %v274
        %v467 = vunpack.c.h.b16 %v274
        %v468 = vunpack.c.l.b16 %v275
        %v469 = vunpack.c.h.b16 %v275
        %v470 = vunpack.c.l.b16 %v276
        %v471 = vunpack.c.h.b16 %v276
        %v472 = vunpack.c.l.b16 %v277
        %v473 = vunpack.c.h.b16 %v277
        %v474 = vunpack.c.l.b16 %v278
        %v475 = vunpack.c.h.b16 %v278
        %v476 = vunpack.c.l.b16 %v279
        %v477 = vunpack.c.h.b16 %v279
        %v478 = vunpack.c.l.b16 %v280
        %v479 = vunpack.c.h.b16 %v280
        %v480 = vunpack.c.l.b16 %v281
        %v481 = vunpack.c.h.b16 %v281
        %v482 = vunpack.c.l.b16 %v282
        %v483 = vunpack.c.h.b16 %v282
        %v484 = vunpack.c.l.b16 %v283
        %v485 = vunpack.c.h.b16 %v283
        %v486 = vunpack.c.l.b16 %v284
        %v487 = vunpack.c.h.b16 %v284
        %v488 = vunpack.c.l.b16 %v285
        %v489 = vunpack.c.h.b16 %v285
        %v490 = vunpack.c.l.b16 %v286
        %v491 = vunpack.c.h.b16 %v286
        %v492 = vunpack.c.l.b16 %v287
        %v493 = vunpack.c.h.b16 %v287
        %v494 = vunpack.c.l.b16 %v288
        %v495 = vunpack.c.h.b16 %v288
        %v496 = vunpack.c.l.b16 %v289
        %v497 = vunpack.c.h.b16 %v289
        %v498 = vpack.c.b16 %v414, %v402
        %v499 = vpack.c.b16 %v415, %v403
        %v500 = vpack.c.b16 %v416, %v404
        %v501 = vpack.c.b16 %v417, %v405
        %v502 = vpack.c.b16 %v418, %v406
        %v503 = vpack.c.b16 %v419, %v407
        %v504 = vpack.c.b16 %v420, %v408
        %v505 = vpack.c.b16 %v421, %v409
        %v506 = vpack.c.b16 %v422, %v410
        %v507 = vpack.c.b16 %v423, %v411
        %v508 = vpack.c.b16 %v424, %v412
        %v509 = vpack.c.b16 %v425, %v413
        %v510 = vpack.c.b16 %v438, %v426
        %v511 = vpack.c.b16 %v439, %v427
        %v512 = vpack.c.b16 %v440, %v428
        %v513 = vpack.c.b16 %v441, %v429
        %v514 = vpack.c.b16 %v442, %v430
        %v515 = vpack.c.b16 %v443, %v431
        %v516 = vpack.c.b16 %v444, %v432
        %v517 = vpack.c.b16 %v445, %v433
        %v518 = vpack.c.b16 %v446, %v434
        %v519 = vpack.c.b16 %v447, %v435
        %v520 = vpack.c.b16 %v448, %v436
        %v521 = vpack.c.b16 %v449, %v437
        %v522 = vpack.c.b16 %v462, %v450
        %v523 = vpack.c.b16 %v463, %v451
        %v524 = vpack.c.b16 %v464, %v452
        %v525 = vpack.c.b16 %v465, %v453
        %v526 = vpack.c.b16 %v466, %v454
        %v527 = vpack.c.b16 %v467, %v455
        %v528 = vpack.c.b16 %v468, %v456
        %v529 = vpack.c.b16 %v469, %v457
        %v530 = vpack.c.b16 %v470, %v458
        %v531 = vpack.c.b16 %v471, %v459
        %v532 = vpack.c.b16 %v472, %v460
        %v533 = vpack.c.b16 %v473, %v461
        %v534 = vpack.c.b16 %v486, %v474
        %v535 = vpack.c.b16 %v487, %v475
        %v536 = vpack.c.b16 %v488, %v476
        %v537 = vpack.c.b16 %v489, %v477
        %v538 = vpack.c.b16 %v490, %v478
        %v539 = vpack.c.b16 %v491, %v479
        %v540 = vpack.c.b16 %v492, %v480
        %v541 = vpack.c.b16 %v493, %v481
        %v542 = vpack.c.b16 %v494, %v482
        %v543 = vpack.c.b16 %v495, %v483
        %v544 = vpack.c.b16 %v496, %v484
        %v545 = vpack.c.b16 %v497, %v485
        %vm594 = vcmask 523264
        %v596 = vsel %vm594, %v241, 0
        %598 = vmatprep.subr.bf16.mxu0 0
        %599 = vmatpush1.bf16.msra.mxu0 0
        %600 = vmatprep.subr.bf16.mxu0 0
        %601 = vmatpush1.bf16.msra.mxu0 0
        %602 = vmatprep.subr.bf16.mxu0 0
        %603 = vmatpush1.bf16.msra.mxu0 0
        %604 = vmatprep.subr.bf16.mxu0 0
        %605 = vmatpush1.bf16.msra.mxu0 0
        %606 = vmatprep.subr.bf16.mxu0 %v535
        %607 = vmatpush1.bf16.msra.mxu0 %v534
        %608 = vmatprep.subr.bf16.mxu0 %v523
        %609 = vmatpush1.bf16.msra.mxu0 %v522
        %610 = vmatprep.subr.bf16.mxu0 %v511
        %611 = vmatpush1.bf16.msra.mxu0 %v510
        %612 = vmatprep.subr.bf16.mxu0 %v499
        %613 = vmatpush1.bf16.msra.mxu0 %v498
        %614 = vmatprep.subr.bf16.mxu0 0
        %615 = vmatpush2.bf16.msra.mxu0 0
        %616 = vmatprep.subr.bf16.mxu0 0
        %617 = vmatpush2.bf16.msra.mxu0 0
        %618 = vmatprep.subr.bf16.mxu0 0
        %619 = vmatpush2.bf16.msra.mxu0 0
        %620 = vmatprep.subr.bf16.mxu0 0
        %621 = vmatpush2.bf16.msra.mxu0 0
        %622 = vmatprep.subr.bf16.mxu0 0
        %623 = vmatpush2.bf16.msra.mxu0 0
        %624 = vmatprep.subr.bf16.mxu0 0
        %625 = vmatpush2.bf16.msra.mxu0 0
        %626 = vmatprep.subr.bf16.mxu0 0
        %627 = vmatpush2.bf16.msra.mxu0 0
        %628 = vmatprep.subr.bf16.mxu0 0
        %629 = vmatpush2.bf16.msra.mxu0 0
        %630 = vmatprep.mubr.bf16.mxu0 0
        %631 = vmatmul.mubr.bf16.gmra.mxu0 %v596
        %v632 = vpop.f32.mrf.mxu0
        %v633 = vadd.f32 %v297, %v632
        %v634 = vpop.f32.mrf.mxu0
        %v635 = vadd.f32 %v301, %v634
        %v636 = vpop.f32.mrf.mxu0
        %v637 = vpop.f32.mrf.mxu0
        %638 = vdwg.mxu0
        %639 = vmatprep.subr.bf16.mxu0 0
        %640 = vmatpush1.bf16.msra.mxu0 0
        %641 = vmatprep.subr.bf16.mxu0 0
        %642 = vmatpush1.bf16.msra.mxu0 0
        %643 = vmatprep.subr.bf16.mxu0 0
        %644 = vmatpush1.bf16.msra.mxu0 0
        %645 = vmatprep.subr.bf16.mxu0 0
        %646 = vmatpush1.bf16.msra.mxu0 0
        %647 = vmatprep.subr.bf16.mxu0 %v537
        %648 = vmatpush1.bf16.msra.mxu0 %v536
        %649 = vmatprep.subr.bf16.mxu0 %v525
        %650 = vmatpush1.bf16.msra.mxu0 %v524
        %651 = vmatprep.subr.bf16.mxu0 %v513
        %652 = vmatpush1.bf16.msra.mxu0 %v512
        %653 = vmatprep.subr.bf16.mxu0 %v501
        %654 = vmatpush1.bf16.msra.mxu0 %v500
        %655 = vmatprep.subr.bf16.mxu0 0
        %656 = vmatpush2.bf16.msra.mxu0 0
        %657 = vmatprep.subr.bf16.mxu0 0
        %658 = vmatpush2.bf16.msra.mxu0 0
        %659 = vmatprep.subr.bf16.mxu0 0
        %660 = vmatpush2.bf16.msra.mxu0 0
        %661 = vmatprep.subr.bf16.mxu0 0
        %662 = vmatpush2.bf16.msra.mxu0 0
        %663 = vmatprep.subr.bf16.mxu0 0
        %664 = vmatpush2.bf16.msra.mxu0 0
        %665 = vmatprep.subr.bf16.mxu0 0
        %666 = vmatpush2.bf16.msra.mxu0 0
        %667 = vmatprep.subr.bf16.mxu0 0
        %668 = vmatpush2.bf16.msra.mxu0 0
        %669 = vmatprep.subr.bf16.mxu0 0
        %670 = vmatpush2.bf16.msra.mxu0 0
        %671 = vmatprep.mubr.bf16.mxu0 0
        %672 = vmatmul.mubr.bf16.gmra.mxu0 %v596
        %v673 = vpop.f32.mrf.mxu0
        %v674 = vadd.f32 %v305, %v673
        %v675 = vpop.f32.mrf.mxu0
        %v676 = vadd.f32 %v309, %v675
        %v677 = vpop.f32.mrf.mxu0
        %v678 = vpop.f32.mrf.mxu0
        %679 = vdwg.mxu0
        %680 = vmatprep.subr.bf16.mxu0 0
        %681 = vmatpush1.bf16.msra.mxu0 0
        %682 = vmatprep.subr.bf16.mxu0 0
        %683 = vmatpush1.bf16.msra.mxu0 0
        %684 = vmatprep.subr.bf16.mxu0 0
        %685 = vmatpush1.bf16.msra.mxu0 0
        %686 = vmatprep.subr.bf16.mxu0 0
        %687 = vmatpush1.bf16.msra.mxu0 0
        %688 = vmatprep.subr.bf16.mxu0 %v539
        %689 = vmatpush1.bf16.msra.mxu0 %v538
        %690 = vmatprep.subr.bf16.mxu0 %v527
        %691 = vmatpush1.bf16.msra.mxu0 %v526
        %692 = vmatprep.subr.bf16.mxu0 %v515
        %693 = vmatpush1.bf16.msra.mxu0 %v514
        %694 = vmatprep.subr.bf16.mxu0 %v503
        %695 = vmatpush1.bf16.msra.mxu0 %v502
        %696 = vmatprep.subr.bf16.mxu0 0
        %697 = vmatpush2.bf16.msra.mxu0 0
        %698 = vmatprep.subr.bf16.mxu0 0
        %699 = vmatpush2.bf16.msra.mxu0 0
        %700 = vmatprep.subr.bf16.mxu0 0
        %701 = vmatpush2.bf16.msra.mxu0 0
        %702 = vmatprep.subr.bf16.mxu0 0
        %703 = vmatpush2.bf16.msra.mxu0 0
        %704 = vmatprep.subr.bf16.mxu0 0
        %705 = vmatpush2.bf16.msra.mxu0 0
        %706 = vmatprep.subr.bf16.mxu0 0
        %707 = vmatpush2.bf16.msra.mxu0 0
        %708 = vmatprep.subr.bf16.mxu0 0
        %709 = vmatpush2.bf16.msra.mxu0 0
        %710 = vmatprep.subr.bf16.mxu0 0
        %711 = vmatpush2.bf16.msra.mxu0 0
        %712 = vmatprep.mubr.bf16.mxu0 0
        %713 = vmatmul.mubr.bf16.gmra.mxu0 %v596
        %v714 = vpop.f32.mrf.mxu0
        %v715 = vadd.f32 %v313, %v714
        %v716 = vpop.f32.mrf.mxu0
        %v717 = vadd.f32 %v317, %v716
        %v718 = vpop.f32.mrf.mxu0
        %v719 = vpop.f32.mrf.mxu0
        %720 = vdwg.mxu0
        %721 = vmatprep.subr.bf16.mxu0 0
        %722 = vmatpush1.bf16.msra.mxu0 0
        %723 = vmatprep.subr.bf16.mxu0 0
        %724 = vmatpush1.bf16.msra.mxu0 0
        %725 = vmatprep.subr.bf16.mxu0 0
        %726 = vmatpush1.bf16.msra.mxu0 0
        %727 = vmatprep.subr.bf16.mxu0 0
        %728 = vmatpush1.bf16.msra.mxu0 0
        %729 = vmatprep.subr.bf16.mxu0 %v541
        %730 = vmatpush1.bf16.msra.mxu0 %v540
        %731 = vmatprep.subr.bf16.mxu0 %v529
        %732 = vmatpush1.bf16.msra.mxu0 %v528
        %733 = vmatprep.subr.bf16.mxu0 %v517
        %734 = vmatpush1.bf16.msra.mxu0 %v516
        %735 = vmatprep.subr.bf16.mxu0 %v505
        %736 = vmatpush1.bf16.msra.mxu0 %v504
        %737 = vmatprep.subr.bf16.mxu0 0
        %738 = vmatpush2.bf16.msra.mxu0 0
        %739 = vmatprep.subr.bf16.mxu0 0
        %740 = vmatpush2.bf16.msra.mxu0 0
        %741 = vmatprep.subr.bf16.mxu0 0
        %742 = vmatpush2.bf16.msra.mxu0 0
        %743 = vmatprep.subr.bf16.mxu0 0
        %744 = vmatpush2.bf16.msra.mxu0 0
        %745 = vmatprep.subr.bf16.mxu0 0
        %746 = vmatpush2.bf16.msra.mxu0 0
        %747 = vmatprep.subr.bf16.mxu0 0
        %748 = vmatpush2.bf16.msra.mxu0 0
        %749 = vmatprep.subr.bf16.mxu0 0
        %750 = vmatpush2.bf16.msra.mxu0 0
        %751 = vmatprep.subr.bf16.mxu0 0
        %752 = vmatpush2.bf16.msra.mxu0 0
        %753 = vmatprep.mubr.bf16.mxu0 0
        %754 = vmatmul.mubr.bf16.gmra.mxu0 %v596
        %v755 = vpop.f32.mrf.mxu0
        %v756 = vadd.f32 %v321, %v755
        %v757 = vpop.f32.mrf.mxu0
        %v758 = vadd.f32 %v325, %v757
        %v759 = vpop.f32.mrf.mxu0
        %v760 = vpop.f32.mrf.mxu0
        %761 = vdwg.mxu0
        %762 = vmatprep.subr.bf16.mxu0 0
        %763 = vmatpush1.bf16.msra.mxu0 0
        %764 = vmatprep.subr.bf16.mxu0 0
        %765 = vmatpush1.bf16.msra.mxu0 0
        %766 = vmatprep.subr.bf16.mxu0 0
        %767 = vmatpush1.bf16.msra.mxu0 0
        %768 = vmatprep.subr.bf16.mxu0 0
        %769 = vmatpush1.bf16.msra.mxu0 0
        %770 = vmatprep.subr.bf16.mxu0 %v543
        %771 = vmatpush1.bf16.msra.mxu0 %v542
        %772 = vmatprep.subr.bf16.mxu0 %v531
        %773 = vmatpush1.bf16.msra.mxu0 %v530
        %774 = vmatprep.subr.bf16.mxu0 %v519
        %775 = vmatpush1.bf16.msra.mxu0 %v518
        %776 = vmatprep.subr.bf16.mxu0 %v507
        %777 = vmatpush1.bf16.msra.mxu0 %v506
        %778 = vmatprep.subr.bf16.mxu0 0
        %779 = vmatpush2.bf16.msra.mxu0 0
        %780 = vmatprep.subr.bf16.mxu0 0
        %781 = vmatpush2.bf16.msra.mxu0 0
        %782 = vmatprep.subr.bf16.mxu0 0
        %783 = vmatpush2.bf16.msra.mxu0 0
        %784 = vmatprep.subr.bf16.mxu0 0
        %785 = vmatpush2.bf16.msra.mxu0 0
        %786 = vmatprep.subr.bf16.mxu0 0
        %787 = vmatpush2.bf16.msra.mxu0 0
        %788 = vmatprep.subr.bf16.mxu0 0
        %789 = vmatpush2.bf16.msra.mxu0 0
        %790 = vmatprep.subr.bf16.mxu0 0
        %791 = vmatpush2.bf16.msra.mxu0 0
        %792 = vmatprep.subr.bf16.mxu0 0
        %793 = vmatpush2.bf16.msra.mxu0 0
        %794 = vmatprep.mubr.bf16.mxu0 0
        %795 = vmatmul.mubr.bf16.gmra.mxu0 %v596
        %v796 = vpop.f32.mrf.mxu0
        %v797 = vadd.f32 %v329, %v796
        %v798 = vpop.f32.mrf.mxu0
        %v799 = vadd.f32 %v333, %v798
        %v800 = vpop.f32.mrf.mxu0
        %v801 = vpop.f32.mrf.mxu0
        %802 = vdwg.mxu0
        %803 = vmatprep.subr.bf16.mxu0 0
        %804 = vmatpush1.bf16.msra.mxu0 0
        %805 = vmatprep.subr.bf16.mxu0 0
        %806 = vmatpush1.bf16.msra.mxu0 0
        %807 = vmatprep.subr.bf16.mxu0 0
        %808 = vmatpush1.bf16.msra.mxu0 0
        %809 = vmatprep.subr.bf16.mxu0 0
        %810 = vmatpush1.bf16.msra.mxu0 0
        %811 = vmatprep.subr.bf16.mxu0 %v545
        %812 = vmatpush1.bf16.msra.mxu0 %v544
        %813 = vmatprep.subr.bf16.mxu0 %v533
        %814 = vmatpush1.bf16.msra.mxu0 %v532
        %815 = vmatprep.subr.bf16.mxu0 %v521
        %816 = vmatpush1.bf16.msra.mxu0 %v520
        %817 = vmatprep.subr.bf16.mxu0 %v509
        %818 = vmatpush1.bf16.msra.mxu0 %v508
        %819 = vmatprep.subr.bf16.mxu0 0
        %820 = vmatpush2.bf16.msra.mxu0 0
        %821 = vmatprep.subr.bf16.mxu0 0
        %822 = vmatpush2.bf16.msra.mxu0 0
        %823 = vmatprep.subr.bf16.mxu0 0
        %824 = vmatpush2.bf16.msra.mxu0 0
        %825 = vmatprep.subr.bf16.mxu0 0
        %826 = vmatpush2.bf16.msra.mxu0 0
        %827 = vmatprep.subr.bf16.mxu0 0
        %828 = vmatpush2.bf16.msra.mxu0 0
        %829 = vmatprep.subr.bf16.mxu0 0
        %830 = vmatpush2.bf16.msra.mxu0 0
        %831 = vmatprep.subr.bf16.mxu0 0
        %832 = vmatpush2.bf16.msra.mxu0 0
        %833 = vmatprep.subr.bf16.mxu0 0
        %834 = vmatpush2.bf16.msra.mxu0 0
        %835 = vmatprep.mubr.bf16.mxu0 0
        %836 = vmatmul.mubr.bf16.gmra.mxu0 %v596
        %v837 = vpop.f32.mrf.mxu0
        %v838 = vadd.f32 %v337, %v837
        %v839 = vpop.f32.mrf.mxu0
        %v840 = vadd.f32 %v341, %v839
        %v841 = vpop.f32.mrf.mxu0
        %v842 = vpop.f32.mrf.mxu0
        %843 = vdwg.mxu0
        %844 = vst [vmem:[%s236] sm:$0xff] %v633
        %845 = vst [vmem:[%s236 + $0x8] sm:$0xff] %v635
        %846 = vst [vmem:[%s236 + $0x10] sm:$0xff] %v674
        %847 = vst [vmem:[%s236 + $0x18] sm:$0xff] %v676
        %848 = vst [vmem:[%s236 + $0x20] sm:$0xff] %v715
        %849 = vst [vmem:[%s236 + $0x28] sm:$0xff] %v717
        %850 = vst [vmem:[%s236 + $0x30] sm:$0xff] %v756
        %851 = vst [vmem:[%s236 + $0x38] sm:$0xff] %v758
        %852 = vst [vmem:[%s236 + $0x40] sm:$0xff] %v797
        %853 = vst [vmem:[%s236 + $0x48] sm:$0xff] %v799
        %854 = vst [vmem:[%s236 + $0x50] sm:$0xff] %v838
        %855 = vst [vmem:[%s236 + $0x58] sm:$0xff] %v840
        %s856 = sand.u32 %s102, 1
        %s857 = scalar_lea.sflag [#allocation4], %s856
        %s858 = sand.u32 %s102, 1
        %s859 = smul.addr %s858, 96
        %s860 = scalar_lea.vmem [#allocation8], %s859
        // Predicated region
        $region45: #{tpu_custom_call.1} parent=31 // pred_check
          %p861 = pneg %p112
        $region46: #{tpu_custom_call.1} parent=31 // pred_check_branch
          %863 = sbr.rel (%p861) target = $region48
        $region47: #{tpu_custom_call.1} parent=31 // pred_region
          %s864 = smul.u32 12, %s21
          %s866 = ssub.s32 1536, 1536
          %867 = vsyncadd %s857, %s866
          %s868 = smul.addr %s864, 128
          %s869 = scalar_lea.hbm %s3, %s868
          %s871 = sshll.u32 %s860, 4
          %s872 = int_to_ptr.vmem [resolvable:$true] %s871
          %874 = dma.vmem_to_hbm [thread:$0]  %s872, 1536, %s869, %s857
        $region48: #{tpu_custom_call.1} parent=31 // pred_fallthru
          _
      $region32: #{tpu_custom_call.1} parent=5 // pred_fallthru
        _
      %p875 = scmp.le.s32.totalorder 2, %s16
      // Predicated region
      $region49: #{tpu_custom_call.1} parent=5 // pred_check
        %p876 = pneg %p875
      $region50: #{tpu_custom_call.1} parent=5 // pred_check_branch
        %878 = sbr.rel (%p876) target = $region52
      $region51: #{tpu_custom_call.1} parent=5 // pred_region
        %s879 = ssub.s32 %s16, 2
        // Predicated region
        $region53: #{tpu_custom_call.1} parent=51 // pred_check
          %p880 = pneg %p118
        $region54: #{tpu_custom_call.1} parent=51 // pred_check_branch
          %882 = sbr.rel (%p880) target = $region56
        $region55: #{tpu_custom_call.1} parent=51 // pred_region
          %s883 = sand.u32 %s103, 1
          %s884 = scalar_lea.sflag [#allocation4], %s883
          %s885 = sand.u32 %s103, 1
          %s886 = smul.addr %s885, 96
          %s887 = scalar_lea.vmem [#allocation8], %s886
          %888 = dma.done %s884, 1536
        $region56: #{tpu_custom_call.1} parent=51 // pred_fallthru
          _
      $region52: #{tpu_custom_call.1} parent=5 // pred_fallthru
        _
    $region6: #{tpu_custom_call.1} parent=1 // loop_footer
      %s20 = sadd.s32 1, %s16
    $region7: #{tpu_custom_call.1} parent=1 // loop_footer_branch
      %15 = sbr.rel target = $region3
    $region8: #{tpu_custom_call.1} parent=1 // loop_exit
      _
    %889 = vsyncpa [#allocation3], 1
    %s890 = scalar_lea.sflag [#allocation3], 1
    %891 = vsyncpa %s890, 1
    %892 = vsyncpa [#allocation6], 1
    %s893 = scalar_lea.sflag [#allocation6], 1
    %894 = vsyncpa %s893, 1
    %895 = vsyncpa [#allocation4], 1
    %s896 = scalar_lea.sflag [#allocation4], 1
    %897 = vsyncpa %s896, 1

</llo_original>
